<compile_context>
chip_gen: v7x
topology: tpu7x:2x2x1
jax: 0.10.0
libtpu: 0.0.40
codegen_flags: <defaults>
</compile_context>

<pallas_src>
import jax
import jax.numpy as jnp
from jax.experimental import pallas as pl
from jax.experimental.pallas import tpu as pltpu


def mlp_kernel(x_ref, w1_ref, b1_ref, w2_ref, b2_ref, w3_ref, b3_ref, o_ref):
    x = x_ref[...]                                   # [3, tm]   (batch on lanes)
    w1 = w1_ref[...]                                 # [64, 3]

    # fc1: K=3 -> three VPU broadcast FMAs (frees the MXU / vex slot).
    h1 = b1_ref[...] + w1[:, 0:1] * x[0:1, :]        # [64, tm]
    h1 = h1 + w1[:, 1:2] * x[1:2, :]
    h1 = h1 + w1[:, 2:3] * x[2:3, :]
    h1 = jnp.maximum(h1, 0.0)

    # fc2: [32,64] @ [64,tm] on the MXU.
    h2 = jnp.dot(w2_ref[...], h1, preferred_element_type=jnp.float32) + b2_ref[...]
    h2 = jnp.maximum(h2, 0.0)                        # [32, tm]

    # fc3: [1,32] @ [32,tm]; bias is a scalar from SMEM. Lane-dense store.
    o = jnp.dot(w3_ref[...], h2, preferred_element_type=jnp.float32)   # [1, tm]
    o_ref[...] = o + b3_ref[0, 0]


def mlp_forward(x, params, *, tm=1024):
    """x: [B, 3] float32; params in PyTorch layout (w: [out,in], b: [out])."""
    B, D_in = x.shape
    assert D_in == 3

    # Batch tile: multiple of 128 (lane width), no larger than the 128-rounded
    # batch, default 1024 (fits easily in VMEM: h1 is tm*64*4 B = 256 KiB).
    b128 = ((B + 127) // 128) * 128
    tm = max(128, min(((int(tm) + 127) // 128) * 128, b128))
    Bp = ((B + tm - 1) // tm) * tm                   # pad batch to tile multiple

    # Transposed, padded input: batch on the last (lane) axis.
    xt = jnp.zeros((D_in, Bp), jnp.float32).at[:, :B].set(x.T)

    w1 = params["w1"].astype(jnp.float32)            # [64, 3]
    w2 = params["w2"].astype(jnp.float32)            # [32, 64]
    w3 = params["w3"].astype(jnp.float32)            # [1, 32]
    b1c = params["b1"].astype(jnp.float32).reshape(-1, 1)   # [64, 1]
    b2c = params["b2"].astype(jnp.float32).reshape(-1, 1)   # [32, 1]
    b3c = params["b3"].astype(jnp.float32).reshape(1, 1)    # [1, 1] -> SMEM scalar

    full = lambda a: pl.BlockSpec(a.shape, lambda i: (0, 0))   # whole (tiny) array

    out = pl.pallas_call(
        mlp_kernel,
        out_shape=jax.ShapeDtypeStruct((1, Bp), jnp.float32),
        grid_spec=pltpu.PrefetchScalarGridSpec(
            num_scalar_prefetch=0,
            grid=(Bp // tm,),
            in_specs=[
                pl.BlockSpec((D_in, tm), lambda i: (0, i)),      # x tile (lane-dense)
                full(w1), full(b1c),
                full(w2), full(b2c),
                full(w3),
                pl.BlockSpec(memory_space=pltpu.MemorySpace.SMEM),  # b3 scalar
            ],
            out_specs=pl.BlockSpec((1, tm), lambda i: (0, i)),   # lane-dense output
        ),
        compiler_params=pltpu.CompilerParams(
            dimension_semantics=("parallel",),                   # v7x: shard tiles over 2 TCs
        ),
    )(xt, w1, b1c, w2, b2c, w3, b3c)

    return out[0, :B].reshape(B, 1)


def init_params(key):
    """Deterministic init matching the PyTorch module's (out, in) layout."""
    k1, k2, k3, k4, k5, k6 = jax.random.split(key, 6)
    s = 0.1
    return {
        "w1": s * jax.random.normal(k1, (64, 3), jnp.float32),
        "b1": s * jax.random.normal(k2, (64,), jnp.float32),
        "w2": s * jax.random.normal(k3, (32, 64), jnp.float32),
        "b2": s * jax.random.normal(k4, (32,), jnp.float32),
        "w3": s * jax.random.normal(k5, (1, 32), jnp.float32),
        "b3": s * jax.random.normal(k6, (1,), jnp.float32),
    }


def mlp_reference(x, p):
    h1 = jnp.maximum(x @ p["w1"].T + p["b1"], 0.0)
    h2 = jnp.maximum(h1 @ p["w2"].T + p["b2"], 0.0)
    return h2 @ p["w3"].T + p["b3"]


if __name__ == "__main__":
    key = jax.random.PRNGKey(0)
    kx, kp = jax.random.split(key)
    B = 200                                   # exercises padding (Bp=256) and grid=2
    x = jax.random.normal(kx, (B, 3), jnp.float32)
    params = init_params(kp)

    out = jax.block_until_ready(mlp_forward(x, params, tm=128))

    ref = mlp_reference(x, params)
    assert out.shape == (B, 1), out.shape
    assert jnp.allclose(out, ref, atol=1e-5, rtol=1e-5), "mismatch vs reference"
    print("KERNEL_OK")
</pallas_src>

<mosaic_0001>
module attributes {stable_mosaic.version = 11 : i64} {
  func.func @mlp_kernel(%arg0: i32, %arg1: memref<3x128xf32, #tpu.memory_space<vmem>>, %arg2: memref<64x3xf32, #tpu.memory_space<vmem>>, %arg3: memref<64x1xf32, #tpu.memory_space<vmem>>, %arg4: memref<32x64xf32, #tpu.memory_space<vmem>>, %arg5: memref<32x1xf32, #tpu.memory_space<vmem>>, %arg6: memref<1x32xf32, #tpu.memory_space<vmem>>, %arg7: memref<1x1xf32, #tpu.memory_space<smem>>, %arg8: memref<1x128xf32, #tpu.memory_space<vmem>>) attributes {dimension_semantics = [#tpu.dimension_semantics<parallel>], iteration_bounds = array<i64: 2>, scalar_prefetch = 0 : i64, scratch_operands = 0 : i64, tpu.core_type = #tpu.core_type<tc>, window_params = [{transform_indices = @transform_0, window_bounds = array<i64: 3, 128>}, {pipeline_mode = #tpu.pipeline_mode<synchronous>, transform_indices = @transform_1, window_bounds = array<i64: 64, 3>}, {pipeline_mode = #tpu.pipeline_mode<synchronous>, transform_indices = @transform_2, window_bounds = array<i64: 64, 1>}, {pipeline_mode = #tpu.pipeline_mode<synchronous>, transform_indices = @transform_3, window_bounds = array<i64: 32, 64>}, {pipeline_mode = #tpu.pipeline_mode<synchronous>, transform_indices = @transform_4, window_bounds = array<i64: 32, 1>}, {pipeline_mode = #tpu.pipeline_mode<synchronous>, transform_indices = @transform_5, window_bounds = array<i64: 1, 32>}, {transform_indices = @transform_6, window_bounds = array<i64: 1, 1>}, {transform_indices = @transform_7, window_bounds = array<i64: 1, 128>}]} {
    %c0 = arith.constant 0 : index
    %c0_0 = arith.constant 0 : index
    %0 = vector.load %arg1[%c0, %c0_0] : memref<3x128xf32, #tpu.memory_space<vmem>>, vector<3x128xf32>
    %c0_1 = arith.constant 0 : index
    %c0_2 = arith.constant 0 : index
    %1 = vector.load %arg2[%c0_1, %c0_2] : memref<64x3xf32, #tpu.memory_space<vmem>>, vector<64x3xf32>
    %c0_3 = arith.constant 0 : index
    %c0_4 = arith.constant 0 : index
    %2 = vector.load %arg3[%c0_3, %c0_4] : memref<64x1xf32, #tpu.memory_space<vmem>>, vector<64x1xf32>
    %3 = vector.extract_strided_slice %1 {offsets = [0, 0], sizes = [64, 1], strides = [1, 1]} : vector<64x3xf32> to vector<64x1xf32>
    %4 = vector.extract_strided_slice %0 {offsets = [0, 0], sizes = [1, 128], strides = [1, 1]} : vector<3x128xf32> to vector<1x128xf32>
    %5 = vector.broadcast %3 : vector<64x1xf32> to vector<64x128xf32>
    %6 = vector.broadcast %4 : vector<1x128xf32> to vector<64x128xf32>
    %7 = arith.mulf %5, %6 : vector<64x128xf32>
    %8 = vector.broadcast %2 : vector<64x1xf32> to vector<64x128xf32>
    %9 = arith.addf %8, %7 : vector<64x128xf32>
    %10 = vector.extract_strided_slice %1 {offsets = [0, 1], sizes = [64, 1], strides = [1, 1]} : vector<64x3xf32> to vector<64x1xf32>
    %11 = vector.extract_strided_slice %0 {offsets = [1, 0], sizes = [1, 128], strides = [1, 1]} : vector<3x128xf32> to vector<1x128xf32>
    %12 = vector.broadcast %10 : vector<64x1xf32> to vector<64x128xf32>
    %13 = vector.broadcast %11 : vector<1x128xf32> to vector<64x128xf32>
    %14 = arith.mulf %12, %13 : vector<64x128xf32>
    %15 = arith.addf %9, %14 : vector<64x128xf32>
    %16 = vector.extract_strided_slice %1 {offsets = [0, 2], sizes = [64, 1], strides = [1, 1]} : vector<64x3xf32> to vector<64x1xf32>
    %17 = vector.extract_strided_slice %0 {offsets = [2, 0], sizes = [1, 128], strides = [1, 1]} : vector<3x128xf32> to vector<1x128xf32>
    %18 = vector.broadcast %16 : vector<64x1xf32> to vector<64x128xf32>
    %19 = vector.broadcast %17 : vector<1x128xf32> to vector<64x128xf32>
    %20 = arith.mulf %18, %19 : vector<64x128xf32>
    %21 = arith.addf %15, %20 : vector<64x128xf32>
    %cst = arith.constant 0.000000e+00 : f32
    %22 = vector.broadcast %cst : f32 to vector<64x128xf32>
    %23 = arith.maximumf %21, %22 : vector<64x128xf32>
    %c0_5 = arith.constant 0 : index
    %c0_6 = arith.constant 0 : index
    %24 = vector.load %arg4[%c0_5, %c0_6] : memref<32x64xf32, #tpu.memory_space<vmem>>, vector<32x64xf32>
    %cst_7 = arith.constant dense<0.000000e+00> : vector<32x128xf32>
    %25 = tpu.matmul %24, %23, %cst_7 {dimension_numbers = #tpu.dot_dimension_numbers<[1], [0], [0], [1], [0, 0, 1, 1], [], []>} : vector<32x64xf32>, vector<64x128xf32>, vector<32x128xf32> -> vector<32x128xf32>
    %c0_8 = arith.constant 0 : index
    %c0_9 = arith.constant 0 : index
    %26 = vector.load %arg5[%c0_8, %c0_9] : memref<32x1xf32, #tpu.memory_space<vmem>>, vector<32x1xf32>
    %27 = vector.broadcast %26 : vector<32x1xf32> to vector<32x128xf32>
    %28 = arith.addf %25, %27 : vector<32x128xf32>
    %cst_10 = arith.constant 0.000000e+00 : f32
    %29 = vector.broadcast %cst_10 : f32 to vector<32x128xf32>
    %30 = arith.maximumf %28, %29 : vector<32x128xf32>
    %c0_11 = arith.constant 0 : index
    %c0_12 = arith.constant 0 : index
    %31 = vector.load %arg6[%c0_11, %c0_12] : memref<1x32xf32, #tpu.memory_space<vmem>>, vector<1x32xf32>
    %cst_13 = arith.constant dense<0.000000e+00> : vector<1x128xf32>
    %32 = tpu.matmul %31, %30, %cst_13 {dimension_numbers = #tpu.dot_dimension_numbers<[1], [0], [0], [1], [0, 0, 1, 1], [], []>} : vector<1x32xf32>, vector<32x128xf32>, vector<1x128xf32> -> vector<1x128xf32>
    %c0_14 = arith.constant 0 : index
    %c0_15 = arith.constant 0 : index
    %33 = memref.load %arg7[%c0_14, %c0_15] : memref<1x1xf32, #tpu.memory_space<smem>>
    %34 = vector.broadcast %33 : f32 to vector<1x128xf32>
    %35 = arith.addf %32, %34 : vector<1x128xf32>
    %c0_16 = arith.constant 0 : index
    %c0_17 = arith.constant 0 : index
    %36 = vector.load %arg8[%c0_16, %c0_17] : memref<1x128xf32, #tpu.memory_space<vmem>>, vector<1x128xf32>
    tpu.vector_store %arg8[%c0_16, %c0_17], %35 {strides = array<i32>} : memref<1x128xf32, #tpu.memory_space<vmem>>, vector<1x128xf32>,
    return
  }
  func.func @transform_0(%arg0: i32) -> (i32, i32) {
    %c0_i32 = arith.constant 0 : i32
    %c0_i32_0 = arith.constant 0 : i32
    return %c0_i32, %arg0 : i32, i32
  }
  func.func @transform_1(%arg0: i32) -> (i32, i32) {
    %c0_i32 = arith.constant 0 : i32
    %c0_i32_0 = arith.constant 0 : i32
    %c0_i32_1 = arith.constant 0 : i32
    return %c0_i32, %c0_i32_0 : i32, i32
  }
  func.func @transform_2(%arg0: i32) -> (i32, i32) {
    %c0_i32 = arith.constant 0 : i32
    %c0_i32_0 = arith.constant 0 : i32
    %c0_i32_1 = arith.constant 0 : i32
    return %c0_i32, %c0_i32_0 : i32, i32
  }
  func.func @transform_3(%arg0: i32) -> (i32, i32) {
    %c0_i32 = arith.constant 0 : i32
    %c0_i32_0 = arith.constant 0 : i32
    %c0_i32_1 = arith.constant 0 : i32
    return %c0_i32, %c0_i32_0 : i32, i32
  }
  func.func @transform_4(%arg0: i32) -> (i32, i32) {
    %c0_i32 = arith.constant 0 : i32
    %c0_i32_0 = arith.constant 0 : i32
    %c0_i32_1 = arith.constant 0 : i32
    return %c0_i32, %c0_i32_0 : i32, i32
  }
  func.func @transform_5(%arg0: i32) -> (i32, i32) {
    %c0_i32 = arith.constant 0 : i32
    %c0_i32_0 = arith.constant 0 : i32
    %c0_i32_1 = arith.constant 0 : i32
    return %c0_i32, %c0_i32_0 : i32, i32
  }
  func.func @transform_6(%arg0: i32) -> (i32, i32) {
    %c0_i32 = arith.constant 0 : i32
    %c0_i32_0 = arith.constant 0 : i32
    %c0_i32_1 = arith.constant 0 : i32
    return %c0_i32, %c0_i32_0 : i32, i32
  }
  func.func @transform_7(%arg0: i32) -> (i32, i32) {
    %c0_i32 = arith.constant 0 : i32
    %c0_i32_0 = arith.constant 0 : i32
    return %c0_i32, %arg0 : i32, i32
  }
}

</mosaic_0001>

<llo_original>
// kernel: tpu_custom_call.1
$region0: #{tpu_custom_call.1}
  #allocation0 [shape = 'u32[]', space=smem, size = 0x4, offset = 0x4, fixed_abs, tag = 'smem constant byte address 0x4 - core index']
  #allocation1 [shape = 'u32[144,128]{1,0:T(1,128)}', space=vmem, size = 0x12000, scoped, tag = 'internal scratch']
  #allocation2 [shape = 'f32[1,1]{1,0:T(1,128)S(6)}', space=smem, size = 0x200, scoped, tag = 'scoped memory for tpu_custom_call.1']
  %s0 = inlined_call_operand.vmem [shape: f32[3,256], index: 0, kind: input, shape index: {}]
  %s1 = inlined_call_operand.vmem [shape: f32[64,3], index: 1, kind: input, shape index: {}]
  %s2 = inlined_call_operand.vmem [shape: f32[64,1], index: 2, kind: input, shape index: {}]
  %s3 = inlined_call_operand.vmem [shape: f32[32,64], index: 3, kind: input, shape index: {}]
  %s4 = inlined_call_operand.vmem [shape: f32[32,1], index: 4, kind: input, shape index: {}]
  %s5 = inlined_call_operand.vmem [shape: f32[1,32], index: 5, kind: input, shape index: {}]
  %s6 = inlined_call_operand.<no memory space> [shape: f32[1,1], index: 6, kind: input, shape index: {}]
  %s7 = inlined_call_operand.hbm [shape: f32[1,256], index: 7, kind: output, shape index: {}]
  %s8 = sld [smem:[#allocation0]]
  $region61: #{tpu_custom_call.1} parent=0
    _
  %s10 = ssub.s32 1, %s8
  %s11 = scalar_select 0, %s10, %s8
  %12 = sst [smem:[#allocation2]] %s6
  $region1: #{tpu_custom_call.1} parent=0
    #allocation3 [shape = 'u8[1024]{0}', space=vmem, size = 0x400, scoped, tag = 'output window, operand 0']
    #allocation4 [shape = 's32[2]{0}', space=sflag, size = 0x8, scoped, tag = 'scoped memory for tpu_custom_call.1']
    %13 = vsyncpa [#allocation4], 0
    %s14 = scalar_lea.sflag [#allocation4], 1
    %15 = vsyncpa %s14, 0
    loop: start=0, step=1, limit=4
    $region2: #{tpu_custom_call.1} parent=1 // loop_pre_header
      _
    $region3: #{tpu_custom_call.1} parent=1 // loop_header
      %s17 = sphi 0, %s21
      %p18 = scmp.ge.s32.totalorder %s17, 4
      %s27 = sphi 0, %s29
      %s30 = sphi 0, %s27
      %s31 = sphi 0, %s30
      %s47 = sphi 0, %s31
      %s51 = sphi 0, %s51
      %s53 = sphi 0, %s51
      %s54 = sphi 0, %s53
      %s68 = sphi 0, %s54
      %s72 = sphi 0, %s72
      %s74 = sphi 0, %s72
      %s75 = sphi 0, %s74
      %s89 = sphi 0, %s75
      %s93 = sphi 0, %s93
      %s95 = sphi 0, %s93
      %s96 = sphi 0, %s95
      %s110 = sphi 0, %s96
      %s114 = sphi 0, %s114
      %s116 = sphi 0, %s114
      %s117 = sphi 0, %s116
      %s131 = sphi 0, %s117
      %s135 = sphi 0, %s135
      %s137 = sphi 0, %s135
      %s138 = sphi 0, %s137
      %s152 = sphi 0, %s138
      %s156 = sphi 0, %s156
      %s158 = sphi 0, %s156
      %s159 = sphi 0, %s158
      %s173 = sphi 0, %s159
      %s179 = sphi 0, %s181
      %s182 = sphi 0, %s179
      %s183 = sphi 0, %s182
      %s199 = sphi 0, %s183
    $region4: #{tpu_custom_call.1} parent=1 // loop_header_branch
      %20 = sbr.rel (%p18) target = $region8
    $region5: #{tpu_custom_call.1} parent=1 // loop_body
      %s22 = ssub.s32 %s17, 1
      %s23 = ssub.s32 %s17, 2
      %s24 = sadd.s32 %s17, 1
      %s25 = ssub.s32 %s17, %s24
      %p26 = scmp.eq.s32.totalorder %s25, 0
      %s28 = sadd.s32 %s27, 1
      %s29 = scalar_select %p26, %s27, %s28
      %p32 = pneg %p26
      %p33 = scmp.eq.s32.totalorder %s17, 1
      %p34 = por %p32, %p33
      %p35 = scmp.ne.s32.totalorder %s27, %s30
      %p36 = scmp.eq.s32.totalorder %s17, 0
      %p37 = por %p35, %p36
      %p38 = scmp.ne.s32.totalorder %s27, %s30
      %p39 = scmp.eq.s32.totalorder %s22, 1
      %p40 = por %p38, %p39
      %p41 = scmp.ne.s32.totalorder %s30, %s31
      %p42 = scmp.eq.s32.totalorder %s22, 0
      %p43 = por %p41, %p42
      %p44 = scmp.ne.s32.totalorder %s30, %s31
      %p45 = scmp.eq.s32.totalorder %s23, 1
      %p46 = por %p44, %p45
      %p48 = scmp.ne.s32.totalorder %s31, %s47
      %p49 = scmp.eq.s32.totalorder %s23, 0
      %p50 = por %p48, %p49
      %s52 = sadd.s32 %s51, 1
      %p55 = scmp.eq.s32.totalorder %s17, 1
      %p56 = scmp.ne.s32.totalorder %s51, %s53
      %p57 = scmp.eq.s32.totalorder %s17, 0
      %p58 = por %p56, %p57
      %p59 = scmp.ne.s32.totalorder %s51, %s53
      %p60 = scmp.eq.s32.totalorder %s22, 1
      %p61 = por %p59, %p60
      %p62 = scmp.ne.s32.totalorder %s53, %s54
      %p63 = scmp.eq.s32.totalorder %s22, 0
      %p64 = por %p62, %p63
      %p65 = scmp.ne.s32.totalorder %s53, %s54
      %p66 = scmp.eq.s32.totalorder %s23, 1
      %p67 = por %p65, %p66
      %p69 = scmp.ne.s32.totalorder %s54, %s68
      %p70 = scmp.eq.s32.totalorder %s23, 0
      %p71 = por %p69, %p70
      %s73 = sadd.s32 %s72, 1
      %p76 = scmp.eq.s32.totalorder %s17, 1
      %p77 = scmp.ne.s32.totalorder %s72, %s74
      %p78 = scmp.eq.s32.totalorder %s17, 0
      %p79 = por %p77, %p78
      %p80 = scmp.ne.s32.totalorder %s72, %s74
      %p81 = scmp.eq.s32.totalorder %s22, 1
      %p82 = por %p80, %p81
      %p83 = scmp.ne.s32.totalorder %s74, %s75
      %p84 = scmp.eq.s32.totalorder %s22, 0
      %p85 = por %p83, %p84
      %p86 = scmp.ne.s32.totalorder %s74, %s75
      %p87 = scmp.eq.s32.totalorder %s23, 1
      %p88 = por %p86, %p87
      %p90 = scmp.ne.s32.totalorder %s75, %s89
      %p91 = scmp.eq.s32.totalorder %s23, 0
      %p92 = por %p90, %p91
      %s94 = sadd.s32 %s93, 1
      %p97 = scmp.eq.s32.totalorder %s17, 1
      %p98 = scmp.ne.s32.totalorder %s93, %s95
      %p99 = scmp.eq.s32.totalorder %s17, 0
      %p100 = por %p98, %p99
      %p101 = scmp.ne.s32.totalorder %s93, %s95
      %p102 = scmp.eq.s32.totalorder %s22, 1
      %p103 = por %p101, %p102
      %p104 = scmp.ne.s32.totalorder %s95, %s96
      %p105 = scmp.eq.s32.totalorder %s22, 0
      %p106 = por %p104, %p105
      %p107 = scmp.ne.s32.totalorder %s95, %s96
      %p108 = scmp.eq.s32.totalorder %s23, 1
      %p109 = por %p107, %p108
      %p111 = scmp.ne.s32.totalorder %s96, %s110
      %p112 = scmp.eq.s32.totalorder %s23, 0
      %p113 = por %p111, %p112
      %s115 = sadd.s32 %s114, 1
      %p118 = scmp.eq.s32.totalorder %s17, 1
      %p119 = scmp.ne.s32.totalorder %s114, %s116
      %p120 = scmp.eq.s32.totalorder %s17, 0
      %p121 = por %p119, %p120
      %p122 = scmp.ne.s32.totalorder %s114, %s116
      %p123 = scmp.eq.s32.totalorder %s22, 1
      %p124 = por %p122, %p123
      %p125 = scmp.ne.s32.totalorder %s116, %s117
      %p126 = scmp.eq.s32.totalorder %s22, 0
      %p127 = por %p125, %p126
      %p128 = scmp.ne.s32.totalorder %s116, %s117
      %p129 = scmp.eq.s32.totalorder %s23, 1
      %p130 = por %p128, %p129
      %p132 = scmp.ne.s32.totalorder %s117, %s131
      %p133 = scmp.eq.s32.totalorder %s23, 0
      %p134 = por %p132, %p133
      %s136 = sadd.s32 %s135, 1
      %p139 = scmp.eq.s32.totalorder %s17, 1
      %p140 = scmp.ne.s32.totalorder %s135, %s137
      %p141 = scmp.eq.s32.totalorder %s17, 0
      %p142 = por %p140, %p141
      %p143 = scmp.ne.s32.totalorder %s135, %s137
      %p144 = scmp.eq.s32.totalorder %s22, 1
      %p145 = por %p143, %p144
      %p146 = scmp.ne.s32.totalorder %s137, %s138
      %p147 = scmp.eq.s32.totalorder %s22, 0
      %p148 = por %p146, %p147
      %p149 = scmp.ne.s32.totalorder %s137, %s138
      %p150 = scmp.eq.s32.totalorder %s23, 1
      %p151 = por %p149, %p150
      %p153 = scmp.ne.s32.totalorder %s138, %s152
      %p154 = scmp.eq.s32.totalorder %s23, 0
      %p155 = por %p153, %p154
      %s157 = sadd.s32 %s156, 1
      %p160 = scmp.eq.s32.totalorder %s17, 1
      %p161 = scmp.ne.s32.totalorder %s156, %s158
      %p162 = scmp.eq.s32.totalorder %s17, 0
      %p163 = por %p161, %p162
      %p164 = scmp.ne.s32.totalorder %s156, %s158
      %p165 = scmp.eq.s32.totalorder %s22, 1
      %p166 = por %p164, %p165
      %p167 = scmp.ne.s32.totalorder %s158, %s159
      %p168 = scmp.eq.s32.totalorder %s22, 0
      %p169 = por %p167, %p168
      %p170 = scmp.ne.s32.totalorder %s158, %s159
      %p171 = scmp.eq.s32.totalorder %s23, 1
      %p172 = por %p170, %p171
      %p174 = scmp.ne.s32.totalorder %s159, %s173
      %p175 = scmp.eq.s32.totalorder %s23, 0
      %p176 = por %p174, %p175
      %s177 = ssub.s32 %s17, %s24
      %p178 = scmp.eq.s32.totalorder %s177, 0
      %s180 = sadd.s32 %s179, 1
      %s181 = scalar_select %p178, %s179, %s180
      %p184 = pneg %p178
      %p185 = scmp.eq.s32.totalorder %s17, 1
      %p186 = por %p184, %p185
      %p187 = scmp.ne.s32.totalorder %s179, %s182
      %p188 = scmp.eq.s32.totalorder %s17, 0
      %p189 = por %p187, %p188
      %p190 = scmp.ne.s32.totalorder %s179, %s182
      %p191 = scmp.eq.s32.totalorder %s22, 1
      %p192 = por %p190, %p191
      %p193 = scmp.ne.s32.totalorder %s182, %s183
      %p194 = scmp.eq.s32.totalorder %s22, 0
      %p195 = por %p193, %p194
      %p196 = scmp.ne.s32.totalorder %s182, %s183
      %p197 = scmp.eq.s32.totalorder %s23, 1
      %p198 = por %p196, %p197
      %p200 = scmp.ne.s32.totalorder %s183, %s199
      %p201 = scmp.eq.s32.totalorder %s23, 0
      %p202 = por %p200, %p201
      %p203 = scmp.le.s32.totalorder 1, %s17
      %p204 = scmp.lt.s32.totalorder %s17, 3
      %p205 = pnand %p203, %p204
      %p206 = pneg %p205
      // Predicated region
      $region9: #{tpu_custom_call.1} parent=5 // pred_check
        _
      $region10: #{tpu_custom_call.1} parent=5 // pred_check_branch
        %208 = sbr.rel (%p205) target = $region12
      $region11: #{tpu_custom_call.1} parent=5 // pred_region
        %s209 = ssub.s32 %s17, 1
        // Predicated region
        $region13: #{tpu_custom_call.1} parent=11 // pred_check
          %p210 = pneg %p64
        $region14: #{tpu_custom_call.1} parent=11 // pred_check_branch
          %212 = sbr.rel (%p210) target = $region16
        $region15: #{tpu_custom_call.1} parent=11 // pred_region
          _
        $region16: #{tpu_custom_call.1} parent=11 // pred_fallthru
          _
        // Predicated region
        $region17: #{tpu_custom_call.1} parent=11 // pred_check
          %p213 = pneg %p85
        $region18: #{tpu_custom_call.1} parent=11 // pred_check_branch
          %215 = sbr.rel (%p213) target = $region20
        $region19: #{tpu_custom_call.1} parent=11 // pred_region
          _
        $region20: #{tpu_custom_call.1} parent=11 // pred_fallthru
          _
        // Predicated region
        $region21: #{tpu_custom_call.1} parent=11 // pred_check
          %p216 = pneg %p106
        $region22: #{tpu_custom_call.1} parent=11 // pred_check_branch
          %218 = sbr.rel (%p216) target = $region24
        $region23: #{tpu_custom_call.1} parent=11 // pred_region
          _
        $region24: #{tpu_custom_call.1} parent=11 // pred_fallthru
          _
        // Predicated region
        $region25: #{tpu_custom_call.1} parent=11 // pred_check
          %p219 = pneg %p127
        $region26: #{tpu_custom_call.1} parent=11 // pred_check_branch
          %221 = sbr.rel (%p219) target = $region28
        $region27: #{tpu_custom_call.1} parent=11 // pred_region
          _
        $region28: #{tpu_custom_call.1} parent=11 // pred_fallthru
          _
        // Predicated region
        $region29: #{tpu_custom_call.1} parent=11 // pred_check
          %p222 = pneg %p148
        $region30: #{tpu_custom_call.1} parent=11 // pred_check_branch
          %224 = sbr.rel (%p222) target = $region32
        $region31: #{tpu_custom_call.1} parent=11 // pred_region
          _
        $region32: #{tpu_custom_call.1} parent=11 // pred_fallthru
          _
        // Predicated region
        $region33: #{tpu_custom_call.1} parent=11 // pred_check
          %p225 = pneg %p169
        $region34: #{tpu_custom_call.1} parent=11 // pred_check_branch
          %227 = sbr.rel (%p225) target = $region36
        $region35: #{tpu_custom_call.1} parent=11 // pred_region
          _
        $region36: #{tpu_custom_call.1} parent=11 // pred_fallthru
          _
      $region12: #{tpu_custom_call.1} parent=5 // pred_fallthru
        _
      %p228 = scmp.lt.s32.totalorder %s17, 2
      // Predicated region
      $region37: #{tpu_custom_call.1} parent=5 // pred_check
        %p229 = pneg %p228
      $region38: #{tpu_custom_call.1} parent=5 // pred_check_branch
        %231 = sbr.rel (%p229) target = $region40
      $region39: #{tpu_custom_call.1} parent=5 // pred_region
        // Predicated region
        $region41: #{tpu_custom_call.1} parent=39 // pred_check
          %p232 = pneg %p37
        $region42: #{tpu_custom_call.1} parent=39 // pred_check_branch
          %234 = sbr.rel (%p232) target = $region44
        $region43: #{tpu_custom_call.1} parent=39 // pred_region
          %p235 = scmp.lt.s32.totalorder %s17, 1
          %s236 = scalar_select %p235, %s17, 1
          %s237 = smul.addr %s236, 4
          %s238 = scalar_lea.vmem %s0, %s237
        $region44: #{tpu_custom_call.1} parent=39 // pred_fallthru
          _
      $region40: #{tpu_custom_call.1} parent=5 // pred_fallthru
        _
      %p239 = scmp.le.s32.totalorder 1, %s17
      %p240 = scmp.lt.s32.totalorder %s17, 3
      %p241 = pnand %p239, %p240
      %p242 = pneg %p241
      // Predicated region
      $region45: #{tpu_custom_call.1} parent=5 // pred_check
        _
      $region46: #{tpu_custom_call.1} parent=5 // pred_check_branch
        %244 = sbr.rel (%p241) target = $region48
      $region47: #{tpu_custom_call.1} parent=5 // pred_region
        %s245 = ssub.s32 %s17, 1
        %p246 = scmp.lt.s32.totalorder %s22, 1
        %s247 = scalar_select %p246, %s22, 1
        %s248 = smul.addr %s247, 4
        %s249 = scalar_lea.vmem %s0, %s248
        %p250 = pneg %p43
        %p251 = pneg %p40
        %p252 = pneg %p64
        %p253 = pneg %p61
        %p254 = pneg %p85
        %p255 = pneg %p82
        %p256 = pneg %p106
        %p257 = pneg %p103
        %p258 = pneg %p127
        %p259 = pneg %p124
        %p260 = pneg %p148
        %p261 = pneg %p145
        %p262 = pneg %p169
        %p263 = pneg %p166
        %p264 = pneg %p195
        %p265 = pneg %p192
        %s266 = sand.u32 %s182, 1
        %s267 = scalar_lea.sflag [#allocation4], %s266
        %s268 = sand.u32 %s182, 1
        %s269 = scalar_lea.vmem [#allocation3], %s268
        %p270 = scmp.lt.s32.totalorder %s22, 1
        %s271 = scalar_select %p270, %s22, 1
        %s272 = smul.addr %s271, 4
        %s273 = scalar_lea.vmem %s0, %s272
        %v274 = vld [vmem:[%s273] sm:$0x7]
        %v275 = vld [vmem:[%s1] sm:$0xff]
        %v276 = vld [vmem:[%s1 + $0x8] sm:$0xff]
        %v277 = vld [vmem:[%s1 + $0x10] sm:$0xff]
        %v278 = vld [vmem:[%s1 + $0x18] sm:$0xff]
        %v279 = vld [vmem:[%s1 + $0x20] sm:$0xff]
        %v280 = vld [vmem:[%s1 + $0x28] sm:$0xff]
        %v281 = vld [vmem:[%s1 + $0x30] sm:$0xff]
        %v282 = vld [vmem:[%s1 + $0x38] sm:$0xff]
        %v283 = vld [vmem:[%s2] sm:$0xff]
        %v284 = vld [vmem:[%s2 + $0x8] sm:$0xff]
        %v285 = vld [vmem:[%s2 + $0x10] sm:$0xff]
        %v286 = vld [vmem:[%s2 + $0x18] sm:$0xff]
        %v287 = vld [vmem:[%s2 + $0x20] sm:$0xff]
        %v288 = vld [vmem:[%s2 + $0x28] sm:$0xff]
        %v289 = vld [vmem:[%s2 + $0x30] sm:$0xff]
        %v290 = vld [vmem:[%s2 + $0x38] sm:$0xff]
        %292 = vset.pattern.permute.xlu0 0
        %293 = vperm.xlu0 %292, %v275
        %v294 = vpop.permute.xlu0 %293
        %297 = vset.pattern.permute.xlu0 0
        %298 = vperm.xlu0 %297, %v276
        %v299 = vpop.permute.xlu0 %298
        %302 = vset.pattern.permute.xlu0 0
        %303 = vperm.xlu0 %302, %v277
        %v304 = vpop.permute.xlu0 %303
        %307 = vset.pattern.permute.xlu0 0
        %308 = vperm.xlu0 %307, %v278
        %v309 = vpop.permute.xlu0 %308
        %312 = vset.pattern.permute.xlu0 0
        %313 = vperm.xlu0 %312, %v279
        %v314 = vpop.permute.xlu0 %313
        %317 = vset.pattern.permute.xlu0 0
        %318 = vperm.xlu0 %317, %v280
        %v319 = vpop.permute.xlu0 %318
        %322 = vset.pattern.permute.xlu0 0
        %323 = vperm.xlu0 %322, %v281
        %v324 = vpop.permute.xlu0 %323
        %327 = vset.pattern.permute.xlu0 0
        %328 = vperm.xlu0 %327, %v282
        %v329 = vpop.permute.xlu0 %328
        %v331 = vlaneseq
        %v332 = vshrl.u32 %v331, 7
        %v333 = vsub.s32 0, %v332
        %v334 = vrot.slane %v274, %v333
        %v335 = vmul.f32 %v294, %v334
        %v336 = vmul.f32 %v299, %v334
        %v337 = vmul.f32 %v304, %v334
        %v338 = vmul.f32 %v309, %v334
        %v339 = vmul.f32 %v314, %v334
        %v340 = vmul.f32 %v319, %v334
        %v341 = vmul.f32 %v324, %v334
        %v342 = vmul.f32 %v329, %v334
        %344 = vset.pattern.permute.xlu0 0
        %345 = vperm.xlu0 %344, %v283
        %v346 = vpop.permute.xlu0 %345
        %349 = vset.pattern.permute.xlu0 0
        %350 = vperm.xlu0 %349, %v284
        %v351 = vpop.permute.xlu0 %350
        %354 = vset.pattern.permute.xlu0 0
        %355 = vperm.xlu0 %354, %v285
        %v356 = vpop.permute.xlu0 %355
        %359 = vset.pattern.permute.xlu0 0
        %360 = vperm.xlu0 %359, %v286
        %v361 = vpop.permute.xlu0 %360
        %364 = vset.pattern.permute.xlu0 0
        %365 = vperm.xlu0 %364, %v287
        %v366 = vpop.permute.xlu0 %365
        %369 = vset.pattern.permute.xlu0 0
        %370 = vperm.xlu0 %369, %v288
        %v371 = vpop.permute.xlu0 %370
        %374 = vset.pattern.permute.xlu0 0
        %375 = vperm.xlu0 %374, %v289
        %v376 = vpop.permute.xlu0 %375
        %379 = vset.pattern.permute.xlu0 0
        %380 = vperm.xlu0 %379, %v290
        %v381 = vpop.permute.xlu0 %380
        %v383 = vadd.f32 %v346, %v335
        %v384 = vadd.f32 %v351, %v336
        %v385 = vadd.f32 %v356, %v337
        %v386 = vadd.f32 %v361, %v338
        %v387 = vadd.f32 %v366, %v339
        %v388 = vadd.f32 %v371, %v340
        %v389 = vadd.f32 %v376, %v341
        %v390 = vadd.f32 %v381, %v342
        %391 = vset.pattern.permute.xlu0 1
        %392 = vperm.xlu0 %391, %v275
        %v393 = vpop.permute.xlu0 %392
        %395 = vset.pattern.permute.xlu0 1
        %396 = vperm.xlu0 %395, %v276
        %v397 = vpop.permute.xlu0 %396
        %399 = vset.pattern.permute.xlu0 1
        %400 = vperm.xlu0 %399, %v277
        %v401 = vpop.permute.xlu0 %400
        %403 = vset.pattern.permute.xlu0 1
        %404 = vperm.xlu0 %403, %v278
        %v405 = vpop.permute.xlu0 %404
        %407 = vset.pattern.permute.xlu0 1
        %408 = vperm.xlu0 %407, %v279
        %v409 = vpop.permute.xlu0 %408
        %411 = vset.pattern.permute.xlu0 1
        %412 = vperm.xlu0 %411, %v280
        %v413 = vpop.permute.xlu0 %412
        %415 = vset.pattern.permute.xlu0 1
        %416 = vperm.xlu0 %415, %v281
        %v417 = vpop.permute.xlu0 %416
        %419 = vset.pattern.permute.xlu0 1
        %420 = vperm.xlu0 %419, %v282
        %v421 = vpop.permute.xlu0 %420
        %v423 = vlaneseq
        %v424 = vshrl.u32 %v423, 7
        %v425 = vsub.s32 1, %v424
        %v426 = vrot.slane %v274, %v425
        %v427 = vmul.f32 %v393, %v426
        %v428 = vmul.f32 %v397, %v426
        %v429 = vmul.f32 %v401, %v426
        %v430 = vmul.f32 %v405, %v426
        %v431 = vmul.f32 %v409, %v426
        %v432 = vmul.f32 %v413, %v426
        %v433 = vmul.f32 %v417, %v426
        %v434 = vmul.f32 %v421, %v426
        %v435 = vadd.f32 %v383, %v427
        %v436 = vadd.f32 %v384, %v428
        %v437 = vadd.f32 %v385, %v429
        %v438 = vadd.f32 %v386, %v430
        %v439 = vadd.f32 %v387, %v431
        %v440 = vadd.f32 %v388, %v432
        %v441 = vadd.f32 %v389, %v433
        %v442 = vadd.f32 %v390, %v434
        %443 = vset.pattern.permute.xlu0 2
        %444 = vperm.xlu0 %443, %v275
        %v445 = vpop.permute.xlu0 %444
        %447 = vset.pattern.permute.xlu0 2
        %448 = vperm.xlu0 %447, %v276
        %v449 = vpop.permute.xlu0 %448
        %451 = vset.pattern.permute.xlu0 2
        %452 = vperm.xlu0 %451, %v277
        %v453 = vpop.permute.xlu0 %452
        %455 = vset.pattern.permute.xlu0 2
        %456 = vperm.xlu0 %455, %v278
        %v457 = vpop.permute.xlu0 %456
        %459 = vset.pattern.permute.xlu0 2
        %460 = vperm.xlu0 %459, %v279
        %v461 = vpop.permute.xlu0 %460
        %463 = vset.pattern.permute.xlu0 2
        %464 = vperm.xlu0 %463, %v280
        %v465 = vpop.permute.xlu0 %464
        %467 = vset.pattern.permute.xlu0 2
        %468 = vperm.xlu0 %467, %v281
        %v469 = vpop.permute.xlu0 %468
        %471 = vset.pattern.permute.xlu0 2
        %472 = vperm.xlu0 %471, %v282
        %v473 = vpop.permute.xlu0 %472
        %v475 = vlaneseq
        %v476 = vshrl.u32 %v475, 7
        %v477 = vsub.s32 2, %v476
        %v478 = vrot.slane %v274, %v477
        %v479 = vmul.f32 %v445, %v478
        %v480 = vmul.f32 %v449, %v478
        %v481 = vmul.f32 %v453, %v478
        %v482 = vmul.f32 %v457, %v478
        %v483 = vmul.f32 %v461, %v478
        %v484 = vmul.f32 %v465, %v478
        %v485 = vmul.f32 %v469, %v478
        %v486 = vmul.f32 %v473, %v478
        %v487 = vadd.f32 %v435, %v479
        %v488 = vadd.f32 %v436, %v480
        %v489 = vadd.f32 %v437, %v481
        %v490 = vadd.f32 %v438, %v482
        %v491 = vadd.f32 %v439, %v483
        %v492 = vadd.f32 %v440, %v484
        %v493 = vadd.f32 %v441, %v485
        %v494 = vadd.f32 %v442, %v486
        %v495 = vmax.f32 %v487, 0.0
        %v496 = vmax.f32 %v488, 0.0
        %v497 = vmax.f32 %v489, 0.0
        %v498 = vmax.f32 %v490, 0.0
        %v499 = vmax.f32 %v491, 0.0
        %v500 = vmax.f32 %v492, 0.0
        %v501 = vmax.f32 %v493, 0.0
        %v502 = vmax.f32 %v494, 0.0
        %v503 = vld [vmem:[%s3] sm:$0xff]
        %v504 = vld [vmem:[%s3 + $0x8] sm:$0xff]
        %v505 = vld [vmem:[%s3 + $0x10] sm:$0xff]
        %v506 = vld [vmem:[%s3 + $0x18] sm:$0xff]
        %v507 = vld [vmem:[%s4] sm:$0xff]
        %v508 = vld [vmem:[%s4 + $0x8] sm:$0xff]
        %v509 = vld [vmem:[%s4 + $0x10] sm:$0xff]
        %v510 = vld [vmem:[%s4 + $0x18] sm:$0xff]
        %512 = vset.pattern.permute.xlu0 0
        %513 = vperm.xlu0 %512, %v507
        %v514 = vpop.permute.xlu0 %513
        %517 = vset.pattern.permute.xlu0 0
        %518 = vperm.xlu0 %517, %v508
        %v519 = vpop.permute.xlu0 %518
        %522 = vset.pattern.permute.xlu0 0
        %523 = vperm.xlu0 %522, %v509
        %v524 = vpop.permute.xlu0 %523
        %527 = vset.pattern.permute.xlu0 0
        %528 = vperm.xlu0 %527, %v510
        %v529 = vpop.permute.xlu0 %528
        %vm531 = vcmask 523264
        %v533 = vsel %vm531, %v503, 0
        %v536 = vsel %vm531, %v504, 0
        %v539 = vsel %vm531, %v505, 0
        %v542 = vsel %vm531, %v506, 0
        %544 = vmatprep.subr.mxu0 0.0
        %545 = vmatpush1.msra.mxu0 %v495
        %546 = vmatprep.subr.mxu0 0.0
        %547 = vmatpush1.msra.mxu0 %v496
        %548 = vmatprep.subr.mxu0 0.0
        %549 = vmatpush1.msra.mxu0 %v497
        %550 = vmatprep.subr.mxu0 0.0
        %551 = vmatpush1.msra.mxu0 %v498
        %552 = vmatprep.subr.mxu0 0.0
        %553 = vmatpush1.msra.mxu0 %v499
        %554 = vmatprep.subr.mxu0 0.0
        %555 = vmatpush1.msra.mxu0 %v500
        %556 = vmatprep.subr.mxu0 0.0
        %557 = vmatpush1.msra.mxu0 %v501
        %558 = vmatprep.subr.mxu0 0.0
        %559 = vmatpush1.msra.mxu0 %v502
        %560 = vmatprep.subr.mxu0 0.0
        %561 = vmatpush1.msra.mxu0 0.0
        %562 = vmatprep.subr.mxu0 0.0
        %563 = vmatpush1.msra.mxu0 0.0
        %564 = vmatprep.subr.mxu0 0.0
        %565 = vmatpush1.msra.mxu0 0.0
        %566 = vmatprep.subr.mxu0 0.0
        %567 = vmatpush1.msra.mxu0 0.0
        %568 = vmatprep.subr.mxu0 0.0
        %569 = vmatpush1.msra.mxu0 0.0
        %570 = vmatprep.subr.mxu0 0.0
        %571 = vmatpush1.msra.mxu0 0.0
        %572 = vmatprep.subr.mxu0 0.0
        %573 = vmatpush1.msra.mxu0 0.0
        %574 = vmatprep.subr.mxu0 0.0
        %575 = vmatpush1.msra.mxu0 0.0
        %576 = vmatprep.subr.mxu0 0.0
        %577 = vmatpush1.msra.mxu0 0.0
        %578 = vmatprep.subr.mxu0 0.0
        %579 = vmatpush1.msra.mxu0 0.0
        %580 = vmatprep.subr.mxu0 0.0
        %581 = vmatpush1.msra.mxu0 0.0
        %582 = vmatprep.subr.mxu0 0.0
        %583 = vmatpush1.msra.mxu0 0.0
        %584 = vmatprep.subr.mxu0 0.0
        %585 = vmatpush1.msra.mxu0 0.0
        %586 = vmatprep.subr.mxu0 0.0
        %587 = vmatpush1.msra.mxu0 0.0
        %588 = vmatprep.subr.mxu0 0.0
        %589 = vmatpush1.msra.mxu0 0.0
        %590 = vmatprep.subr.mxu0 0.0
        %591 = vmatpush1.msra.mxu0 0.0
        %592 = vmatprep.subr.mxu0 0.0
        %593 = vmatpush1.msra.mxu0 0.0
        %594 = vmatprep.subr.mxu0 0.0
        %595 = vmatpush1.msra.mxu0 0.0
        %596 = vmatprep.subr.mxu0 0.0
        %597 = vmatpush1.msra.mxu0 0.0
        %598 = vmatprep.subr.mxu0 0.0
        %599 = vmatpush1.msra.mxu0 0.0
        %600 = vmatprep.subr.mxu0 0.0
        %601 = vmatpush1.msra.mxu0 0.0
        %602 = vmatprep.subr.mxu0 0.0
        %603 = vmatpush1.msra.mxu0 0.0
        %604 = vmatprep.subr.mxu0 0.0
        %605 = vmatpush1.msra.mxu0 0.0
        %606 = vmatprep.subr.mxu0 0.0
        %607 = vmatpush1.msra.mxu0 0.0
        %608 = vmatprep.mubr.f32.mxu0 0.0
        %609 = vmatmul.mubr.f32.gmra.mrb[0].mxu0 %v533
        %v610 = vpop.f32.mrb[0].mxu0
        %v611 = vadd.f32 %v514, %v610
        %v612 = vpop.f32.mrb[0].mxu0
        %613 = vmatprep.mubr.f32.mxu0 0.0
        %614 = vmatmul.mubr.f32.gmra.mrb[0].mxu0 %v536
        %v615 = vpop.f32.mrb[0].mxu0
        %v616 = vadd.f32 %v519, %v615
        %v617 = vpop.f32.mrb[0].mxu0
        %618 = vmatprep.mubr.f32.mxu0 0.0
        %619 = vmatmul.mubr.f32.gmra.mrb[0].mxu0 %v539
        %v620 = vpop.f32.mrb[0].mxu0
        %v621 = vadd.f32 %v524, %v620
        %v622 = vpop.f32.mrb[0].mxu0
        %623 = vmatprep.mubr.f32.mxu0 0.0
        %624 = vmatmul.mubr.f32.gmra.mrb[0].mxu0 %v542
        %v625 = vpop.f32.mrb[0].mxu0
        %v626 = vadd.f32 %v529, %v625
        %v627 = vpop.f32.mrb[0].mxu0
        %628 = vdwg.mxu0
        %v629 = vmax.f32 %v611, 0.0
        %v630 = vmax.f32 %v616, 0.0
        %v631 = vmax.f32 %v621, 0.0
        %v632 = vmax.f32 %v626, 0.0
        %v633 = vld [vmem:[%s5] sm:$0x1]
        %s634 = sld [smem:[#allocation2]]
        %v635 = vstv %s634
        %vm636 = vcmask 261120
        %v638 = vsel %vm636, %v633, 0
        %640 = vmatprep.subr.mxu0 0.0
        %641 = vmatpush1.msra.mxu0 %v629
        %642 = vmatprep.subr.mxu0 0.0
        %643 = vmatpush1.msra.mxu0 %v630
        %644 = vmatprep.subr.mxu0 0.0
        %645 = vmatpush1.msra.mxu0 %v631
        %646 = vmatprep.subr.mxu0 0.0
        %647 = vmatpush1.msra.mxu0 %v632
        %648 = vmatprep.subr.mxu0 0.0
        %649 = vmatpush1.msra.mxu0 0.0
        %650 = vmatprep.subr.mxu0 0.0
        %651 = vmatpush1.msra.mxu0 0.0
        %652 = vmatprep.subr.mxu0 0.0
        %653 = vmatpush1.msra.mxu0 0.0
        %654 = vmatprep.subr.mxu0 0.0
        %655 = vmatpush1.msra.mxu0 0.0
        %656 = vmatprep.subr.mxu0 0.0
        %657 = vmatpush1.msra.mxu0 0.0
        %658 = vmatprep.subr.mxu0 0.0
        %659 = vmatpush1.msra.mxu0 0.0
        %660 = vmatprep.subr.mxu0 0.0
        %661 = vmatpush1.msra.mxu0 0.0
        %662 = vmatprep.subr.mxu0 0.0
        %663 = vmatpush1.msra.mxu0 0.0
        %664 = vmatprep.subr.mxu0 0.0
        %665 = vmatpush1.msra.mxu0 0.0
        %666 = vmatprep.subr.mxu0 0.0
        %667 = vmatpush1.msra.mxu0 0.0
        %668 = vmatprep.subr.mxu0 0.0
        %669 = vmatpush1.msra.mxu0 0.0
        %670 = vmatprep.subr.mxu0 0.0
        %671 = vmatpush1.msra.mxu0 0.0
        %672 = vmatprep.subr.mxu0 0.0
        %673 = vmatpush1.msra.mxu0 0.0
        %674 = vmatprep.subr.mxu0 0.0
        %675 = vmatpush1.msra.mxu0 0.0
        %676 = vmatprep.subr.mxu0 0.0
        %677 = vmatpush1.msra.mxu0 0.0
        %678 = vmatprep.subr.mxu0 0.0
        %679 = vmatpush1.msra.mxu0 0.0
        %680 = vmatprep.subr.mxu0 0.0
        %681 = vmatpush1.msra.mxu0 0.0
        %682 = vmatprep.subr.mxu0 0.0
        %683 = vmatpush1.msra.mxu0 0.0
        %684 = vmatprep.subr.mxu0 0.0
        %685 = vmatpush1.msra.mxu0 0.0
        %686 = vmatprep.subr.mxu0 0.0
        %687 = vmatpush1.msra.mxu0 0.0
        %688 = vmatprep.subr.mxu0 0.0
        %689 = vmatpush1.msra.mxu0 0.0
        %690 = vmatprep.subr.mxu0 0.0
        %691 = vmatpush1.msra.mxu0 0.0
        %692 = vmatprep.subr.mxu0 0.0
        %693 = vmatpush1.msra.mxu0 0.0
        %694 = vmatprep.subr.mxu0 0.0
        %695 = vmatpush1.msra.mxu0 0.0
        %696 = vmatprep.subr.mxu0 0.0
        %697 = vmatpush1.msra.mxu0 0.0
        %698 = vmatprep.subr.mxu0 0.0
        %699 = vmatpush1.msra.mxu0 0.0
        %700 = vmatprep.subr.mxu0 0.0
        %701 = vmatpush1.msra.mxu0 0.0
        %702 = vmatprep.subr.mxu0 0.0
        %703 = vmatpush1.msra.mxu0 0.0
        %704 = vmatprep.mubr.f32.mxu0 0.0
        %705 = vmatmul.mubr.f32.gmra.mrb[0].mxu0 %v638
        %v706 = vpop.f32.mrb[0].mxu0
        %v707 = vadd.f32 %v635, %v706
        %v708 = vpop.f32.mrb[0].mxu0
        %709 = vdwg.mxu0
        %710 = vst [vmem:[%s269] sm:$0x1] %v707
        %s711 = sand.u32 %s182, 1
        %s712 = scalar_lea.sflag [#allocation4], %s711
        %s713 = sand.u32 %s182, 1
        %s714 = scalar_lea.vmem [#allocation3], %s713
        // Predicated region
        $region49: #{tpu_custom_call.1} parent=47 // pred_check
          %p715 = pneg %p192
        $region50: #{tpu_custom_call.1} parent=47 // pred_check_branch
          %717 = sbr.rel (%p715) target = $region52
        $region51: #{tpu_custom_call.1} parent=47 // pred_region
          %s719 = ssub.s32 16, 16
          %720 = vsyncadd %s712, %s719
          %s721 = smul.addr %s22, 16
          %s722 = scalar_lea.hbm %s7, %s721
          %s724 = sshll.u32 %s714, 4
          %s725 = int_to_ptr.vmem [resolvable:$true] %s724
          %727 = dma.vmem_to_hbm [thread:$0]  %s725, 16, %s722, %s712
        $region52: #{tpu_custom_call.1} parent=47 // pred_fallthru
          _
      $region48: #{tpu_custom_call.1} parent=5 // pred_fallthru
        _
      %p728 = scmp.le.s32.totalorder 2, %s17
      // Predicated region
      $region53: #{tpu_custom_call.1} parent=5 // pred_check
        %p729 = pneg %p728
      $region54: #{tpu_custom_call.1} parent=5 // pred_check_branch
        %731 = sbr.rel (%p729) target = $region56
      $region55: #{tpu_custom_call.1} parent=5 // pred_region
        %s732 = ssub.s32 %s17, 2
        // Predicated region
        $region57: #{tpu_custom_call.1} parent=55 // pred_check
          %p733 = pneg %p198
        $region58: #{tpu_custom_call.1} parent=55 // pred_check_branch
          %735 = sbr.rel (%p733) target = $region60
        $region59: #{tpu_custom_call.1} parent=55 // pred_region
          %s736 = sand.u32 %s183, 1
          %s737 = scalar_lea.sflag [#allocation4], %s736
          %s738 = sand.u32 %s183, 1
          %s739 = scalar_lea.vmem [#allocation3], %s738
          %740 = dma.done %s737, 16
        $region60: #{tpu_custom_call.1} parent=55 // pred_fallthru
          _
      $region56: #{tpu_custom_call.1} parent=5 // pred_fallthru
        _
    $region6: #{tpu_custom_call.1} parent=1 // loop_footer
      %s21 = sadd.s32 1, %s17
    $region7: #{tpu_custom_call.1} parent=1 // loop_footer_branch
      %16 = sbr.rel target = $region3
    $region8: #{tpu_custom_call.1} parent=1 // loop_exit
      _
    %741 = vsyncpa [#allocation4], 1
    %s742 = scalar_lea.sflag [#allocation4], 1
    %743 = vsyncpa %s742, 1

</llo_original>
